<compile_context>
chip_gen: v7x
topology: tpu7x:2x2x1
jax: 0.10.0
libtpu: 0.0.40
codegen_flags: <defaults>
</compile_context>

<pallas_src>
import jax
import jax.numpy as jnp
from jax import lax
from jax.experimental import pallas as pl
from jax.experimental.pallas import tpu as pltpu


def _round_up(x, m):
    return ((x + m - 1) // m) * m


def _sublane_multiple(dtype):
    # 8 rows for 4-byte dtypes, 16 for bf16/f16, 32 for int8/fp8.
    return max(8, 32 // max(jnp.dtype(dtype).itemsize, 1))


def _vmem_capacity_bytes():
    try:
        cap = getattr(pltpu.get_tpu_info(), "vmem_capacity_bytes", None)
        if cap:
            return int(cap)
    except Exception:
        pass
    return 64 * 1024 * 1024  # conservative fallback: v7x per-TensorCore VMEM


def _l2norm_kernel(s_ref, x_ref, o_ref):
    # s_ref: (1,) f32 in SMEM (scalar prefetch); x_ref / o_ref: (block_rows, D) in VMEM.
    x = x_ref[...]
    xf = x.astype(jnp.float32)                                # no-op for f32 inputs
    normp = jnp.sum(xf * xf, axis=1, keepdims=True) + 1e-10   # (block_rows, 1) f32
    inv = s_ref[0] * lax.rsqrt(normp)                         # fused scale, EUP rsqrt
    if o_ref.dtype == jnp.float32:
        o_ref[...] = xf * inv
    else:
        # Keep the wide math only for the reduction; the hot broadcast-multiply and
        # store stay in the narrow dtype (halves vreg/store width for bf16).
        o_ref[...] = x * inv.astype(x.dtype)


def _choose_block_rows(n_rows, d, dtype, *, min_steps=8):
    """Pick a row-tile: big enough to amortize per-step overhead, small enough that
    in+out double buffers stay inside the VMEM budget and the grid has enough steps
    to feed both TensorCores; re-balanced so the tail block carries little waste."""
    sub = _sublane_multiple(dtype)
    itemsize = jnp.dtype(dtype).itemsize
    vmem_cap = _vmem_capacity_bytes()

    # in + out, each double-buffered -> 4 resident tiles; use at most ~1/3 of VMEM.
    target_bytes = min(24 << 20, vmem_cap // 3)
    per_row = 4 * d * itemsize
    max_rows = max(sub, (target_bytes // per_row) // sub * sub)

    # Keep >= min_steps grid steps (when N allows) for megacore + pipelining.
    by_steps = _round_up(max(1, pl.cdiv(n_rows, min_steps)), sub)
    block_rows = max(sub, min(max_rows, by_steps))

    # Re-balance across the resulting step count so the partial last block is small.
    n_steps = max(1, pl.cdiv(n_rows, block_rows))
    block_rows = max(sub, _round_up(pl.cdiv(n_rows, n_steps), sub))
    return block_rows


def l2norm_layer(x, s, *, scale=True, block_rows=None):
    """JAX/Pallas equivalent of L2NormLayer.forward for 2-D input x: (N, D)."""
    N, D = x.shape
    itemsize = jnp.dtype(x.dtype).itemsize
    sub = _sublane_multiple(x.dtype)

    if block_rows is None:
        block_rows = _choose_block_rows(N, D, x.dtype)
    block_rows = max(sub, (block_rows // sub) * sub)

    grid = (pl.cdiv(N, block_rows),)

    # scale=False -> multiply by 1.0 (same hot path).
    s_arr = jnp.asarray(s if scale else 1.0, jnp.float32).reshape((1,))

    # 2 buffers each for the input and output tiles, plus headroom.
    vmem_cap = _vmem_capacity_bytes()
    footprint = 4 * block_rows * D * itemsize
    vmem_limit = int(min(max(2 * footprint, 32 << 20),
                         max(vmem_cap - (8 << 20), footprint + (4 << 20))))

    cost = pl.CostEstimate(
        flops=3 * N * D,                      # square + reduce-add + scale-multiply
        transcendentals=N,                    # one rsqrt per row
        bytes_accessed=2 * N * D * itemsize,  # read x + write out
    )

    return pl.pallas_call(
        _l2norm_kernel,
        out_shape=jax.ShapeDtypeStruct((N, D), x.dtype),
        grid_spec=pltpu.PrefetchScalarGridSpec(
            num_scalar_prefetch=1,                               # s -> SMEM
            grid=grid,
            in_specs=[
                # Last dim = full array D (full-extent block: legal even if D % 128 != 0,
                # lane-masked stores on ragged D, no wrapper pad/slice passes).
                pl.BlockSpec((block_rows, D), lambda i, s_ref: (i, 0)),
            ],
            out_specs=pl.BlockSpec((block_rows, D), lambda i, s_ref: (i, 0)),
        ),
        compiler_params=pltpu.CompilerParams(
            dimension_semantics=("parallel",),
            vmem_limit_bytes=vmem_limit,
        ),
        cost_estimate=cost,
    )(s_arr, x)


def l2norm_ref(x, s, scale=True):
    normp = jnp.sum(x * x, axis=1) + 1e-10
    norm = jnp.sqrt(normp)
    out = x / norm[:, None]
    if scale:
        out = out * s
    return out


if __name__ == "__main__":
    key = jax.random.PRNGKey(0)

    # Deterministic parameter init, matching nn.Parameter(torch.FloatTensor([10])).
    s = jnp.float32(10.0)

    # Small shape consistent with the module (2-D input, reduce over dim 1).
    N, D = 16, 128
    x = jax.random.normal(key, (N, D), dtype=jnp.float32)
    out = jax.block_until_ready(l2norm_layer(x, s, scale=True))
    ref = l2norm_ref(x, s, scale=True)
    assert out.shape == x.shape and out.dtype == x.dtype
    assert jnp.allclose(out, ref, atol=1e-5, rtol=1e-5), "mismatch vs reference (aligned)"

    # Ragged shape: partial last row-block (N % block_rows != 0) and D % 128 != 0,
    # handled entirely by masked blocks — no wrapper pad/slice.
    key2 = jax.random.PRNGKey(1)
    N2, D2 = 300, 200
    x2 = jax.random.normal(key2, (N2, D2), dtype=jnp.float32)
    out2 = jax.block_until_ready(l2norm_layer(x2, s, scale=True))
    ref2 = l2norm_ref(x2, s, scale=True)
    assert out2.shape == x2.shape
    assert jnp.allclose(out2, ref2, atol=1e-5, rtol=1e-5), "mismatch vs reference (ragged)"

    # scale=False path.
    out3 = jax.block_until_ready(l2norm_layer(x, s, scale=False))
    assert jnp.allclose(out3, l2norm_ref(x, s, scale=False), atol=1e-5, rtol=1e-5)

    # bf16 path: f32 reduction, narrow-dtype elementwise pass and store.
    x4 = jax.random.normal(jax.random.PRNGKey(2), (40, 256), dtype=jnp.bfloat16)
    out4 = jax.block_until_ready(l2norm_layer(x4, s, scale=True))
    ref4 = l2norm_ref(x4.astype(jnp.float32), s, scale=True)
    assert out4.dtype == jnp.bfloat16
    assert jnp.allclose(out4.astype(jnp.float32), ref4, atol=1e-1, rtol=1e-1)

    print("KERNEL_OK")
</pallas_src>

<mosaic_0001>
module attributes {stable_mosaic.version = 11 : i64} {
  func.func @_l2norm_kernel(%arg0: i32, %arg1: memref<1xf32, #tpu.memory_space<smem>>, %arg2: memref<8x128xf32, #tpu.memory_space<vmem>>, %arg3: memref<8x128xf32, #tpu.memory_space<vmem>>) attributes {dimension_semantics = [#tpu.dimension_semantics<parallel>], iteration_bounds = array<i64: 2>, scalar_prefetch = 1 : i64, scratch_operands = 0 : i64, tpu.core_type = #tpu.core_type<tc>, window_params = [{transform_indices = @transform_0, window_bounds = array<i64: 8, 128>}, {transform_indices = @transform_1, window_bounds = array<i64: 8, 128>}]} {
    %c0 = arith.constant 0 : index
    %c0_0 = arith.constant 0 : index
    %0 = vector.load %arg2[%c0, %c0_0] : memref<8x128xf32, #tpu.memory_space<vmem>>, vector<8x128xf32>
    %1 = arith.mulf %0, %0 : vector<8x128xf32>
    %cst = arith.constant dense<0.000000e+00> : vector<8xf32>
    %2 = vector.multi_reduction <add>, %1, %cst [1] : vector<8x128xf32> to vector<8xf32>
    %3 = vector.shape_cast %2 : vector<8xf32> to vector<8x1xf32>
    %cst_1 = arith.constant 1.000000e-10 : f32
    %4 = vector.broadcast %cst_1 : f32 to vector<8x1xf32>
    %5 = arith.addf %3, %4 : vector<8x1xf32>
    %c0_2 = arith.constant 0 : index
    %6 = memref.load %arg1[%c0_2] : memref<1xf32, #tpu.memory_space<smem>>
    %7 = math.rsqrt %5 : vector<8x1xf32>
    %8 = vector.broadcast %6 : f32 to vector<8x1xf32>
    %9 = arith.mulf %8, %7 : vector<8x1xf32>
    %10 = vector.broadcast %9 : vector<8x1xf32> to vector<8x128xf32>
    %11 = arith.mulf %0, %10 : vector<8x128xf32>
    %c0_3 = arith.constant 0 : index
    %c0_4 = arith.constant 0 : index
    %12 = vector.load %arg3[%c0_3, %c0_4] : memref<8x128xf32, #tpu.memory_space<vmem>>, vector<8x128xf32>
    tpu.vector_store %arg3[%c0_3, %c0_4], %11 {strides = array<i32>} : memref<8x128xf32, #tpu.memory_space<vmem>>, vector<8x128xf32>,
    return
  }
  func.func @transform_0(%arg0: i32, %arg1: memref<1xf32, #tpu.memory_space<smem>>) -> (i32, i32) {
    %c0_i32 = arith.constant 0 : i32
    %c0_i32_0 = arith.constant 0 : i32
    return %arg0, %c0_i32 : i32, i32
  }
  func.func @transform_1(%arg0: i32, %arg1: memref<1xf32, #tpu.memory_space<smem>>) -> (i32, i32) {
    %c0_i32 = arith.constant 0 : i32
    %c0_i32_0 = arith.constant 0 : i32
    return %arg0, %c0_i32 : i32, i32
  }
}

</mosaic_0001>

<llo_original>
// kernel: tpu_custom_call.1
$region0: #{tpu_custom_call.1}
  #allocation0 [shape = 'u32[]', space=smem, size = 0x4, offset = 0x4, fixed_abs, tag = 'smem constant byte address 0x4 - core index']
  #allocation1 [shape = 'u32[144,128]{1,0:T(1,128)}', space=vmem, size = 0x12000, scoped, tag = 'internal scratch']
  #allocation2 [shape = 's32[1]{0}', space=sflag, size = 0x4, scoped, tag = 'scoped memory for tpu_custom_call.1']
  #allocation3 [shape = 'f32[1]{0:T(128)S(6)}', space=smem, size = 0x200, scoped, tag = 'prefetched SMEM operand 0']
  %s0 = inlined_call_operand.<no memory space> [shape: f32[1], index: 0, kind: input, shape index: {}]
  %s1 = inlined_call_operand.hbm [shape: f32[16,128], index: 1, kind: input, shape index: {}]
  %s2 = inlined_call_operand.hbm [shape: f32[16,128], index: 2, kind: output, shape index: {}]
  %s3 = sld [smem:[#allocation0]]
  $region41: #{tpu_custom_call.1} parent=0
    _
  %s5 = ssub.s32 1, %s3
  %s6 = scalar_select 0, %s5, %s3
  %7 = sst [smem:[#allocation3]] %s0
  $region1: #{tpu_custom_call.1} parent=0
    #allocation4 [shape = 'u8[8192]{0}', space=vmem, size = 0x2000, scoped, tag = 'input window, operand 1']
    #allocation5 [shape = 's32[2]{0}', space=sflag, size = 0x8, scoped, tag = 'scoped memory for tpu_custom_call.1']
    #allocation6 [shape = 's32[2]{0}', space=sflag, size = 0x8, scoped, tag = 'scoped memory for tpu_custom_call.1']
    #allocation7 [shape = 'u8[8192]{0}', space=vmem, size = 0x2000, scoped, tag = 'output window, operand 0']
    %8 = vsyncpa [#allocation5], 0
    %s9 = scalar_lea.sflag [#allocation5], 1
    %10 = vsyncpa %s9, 0
    %11 = vsyncpa [#allocation6], 0
    %s12 = scalar_lea.sflag [#allocation6], 1
    %13 = vsyncpa %s12, 0
    loop: start=0, step=1, limit=4
    $region2: #{tpu_custom_call.1} parent=1 // loop_pre_header
      _
    $region3: #{tpu_custom_call.1} parent=1 // loop_header
      %s15 = sphi 0, %s19
      %p16 = scmp.ge.s32.totalorder %s15, 4
      %s25 = sphi 0, %s27
      %s28 = sphi 0, %s25
      %s29 = sphi 0, %s28
      %s45 = sphi 0, %s29
      %s51 = sphi 0, %s53
      %s54 = sphi 0, %s51
      %s55 = sphi 0, %s54
      %s71 = sphi 0, %s55
    $region4: #{tpu_custom_call.1} parent=1 // loop_header_branch
      %18 = sbr.rel (%p16) target = $region8
    $region5: #{tpu_custom_call.1} parent=1 // loop_body
      %s20 = ssub.s32 %s15, 1
      %s21 = ssub.s32 %s15, 2
      %s22 = sadd.s32 %s15, 1
      %s23 = ssub.s32 %s15, %s22
      %p24 = scmp.eq.s32.totalorder %s23, 0
      %s26 = sadd.s32 %s25, 1
      %s27 = scalar_select %p24, %s25, %s26
      %p30 = pneg %p24
      %p31 = scmp.eq.s32.totalorder %s15, 1
      %p32 = por %p30, %p31
      %p33 = scmp.ne.s32.totalorder %s25, %s28
      %p34 = scmp.eq.s32.totalorder %s15, 0
      %p35 = por %p33, %p34
      %p36 = scmp.ne.s32.totalorder %s25, %s28
      %p37 = scmp.eq.s32.totalorder %s20, 1
      %p38 = por %p36, %p37
      %p39 = scmp.ne.s32.totalorder %s28, %s29
      %p40 = scmp.eq.s32.totalorder %s20, 0
      %p41 = por %p39, %p40
      %p42 = scmp.ne.s32.totalorder %s28, %s29
      %p43 = scmp.eq.s32.totalorder %s21, 1
      %p44 = por %p42, %p43
      %p46 = scmp.ne.s32.totalorder %s29, %s45
      %p47 = scmp.eq.s32.totalorder %s21, 0
      %p48 = por %p46, %p47
      %s49 = ssub.s32 %s15, %s22
      %p50 = scmp.eq.s32.totalorder %s49, 0
      %s52 = sadd.s32 %s51, 1
      %s53 = scalar_select %p50, %s51, %s52
      %p56 = pneg %p50
      %p57 = scmp.eq.s32.totalorder %s15, 1
      %p58 = por %p56, %p57
      %p59 = scmp.ne.s32.totalorder %s51, %s54
      %p60 = scmp.eq.s32.totalorder %s15, 0
      %p61 = por %p59, %p60
      %p62 = scmp.ne.s32.totalorder %s51, %s54
      %p63 = scmp.eq.s32.totalorder %s20, 1
      %p64 = por %p62, %p63
      %p65 = scmp.ne.s32.totalorder %s54, %s55
      %p66 = scmp.eq.s32.totalorder %s20, 0
      %p67 = por %p65, %p66
      %p68 = scmp.ne.s32.totalorder %s54, %s55
      %p69 = scmp.eq.s32.totalorder %s21, 1
      %p70 = por %p68, %p69
      %p72 = scmp.ne.s32.totalorder %s55, %s71
      %p73 = scmp.eq.s32.totalorder %s21, 0
      %p74 = por %p72, %p73
      %p75 = scmp.le.s32.totalorder 1, %s15
      %p76 = scmp.lt.s32.totalorder %s15, 3
      %p77 = pnand %p75, %p76
      %p78 = pneg %p77
      // Predicated region
      $region9: #{tpu_custom_call.1} parent=5 // pred_check
        _
      $region10: #{tpu_custom_call.1} parent=5 // pred_check_branch
        %80 = sbr.rel (%p77) target = $region12
      $region11: #{tpu_custom_call.1} parent=5 // pred_region
        %s81 = ssub.s32 %s15, 1
      $region12: #{tpu_custom_call.1} parent=5 // pred_fallthru
        _
      %p82 = scmp.lt.s32.totalorder %s15, 2
      // Predicated region
      $region13: #{tpu_custom_call.1} parent=5 // pred_check
        %p83 = pneg %p82
      $region14: #{tpu_custom_call.1} parent=5 // pred_check_branch
        %85 = sbr.rel (%p83) target = $region16
      $region15: #{tpu_custom_call.1} parent=5 // pred_region
        // Predicated region
        $region17: #{tpu_custom_call.1} parent=15 // pred_check
          %p86 = pneg %p35
        $region18: #{tpu_custom_call.1} parent=15 // pred_check_branch
          %88 = sbr.rel (%p86) target = $region20
        $region19: #{tpu_custom_call.1} parent=15 // pred_region
          %s89 = sand.u32 %s25, 1
          %s90 = scalar_lea.sflag [#allocation5], %s89
          %s91 = sand.u32 %s25, 1
          %s92 = smul.addr %s91, 8
          %s93 = scalar_lea.vmem [#allocation4], %s92
          %s95 = ssub.s32 128, 128
          %96 = vsyncadd %s90, %s95
          %s97 = smul.addr %s15, 128
          %s98 = scalar_lea.hbm %s1, %s97
          %s100 = sshll.u32 %s93, 4
          %s101 = int_to_ptr.vmem [resolvable:$true] %s100
          %103 = dma.hbm_to_vmem [thread:$0]  %s98, 128, %s101, %s90
        $region20: #{tpu_custom_call.1} parent=15 // pred_fallthru
          _
      $region16: #{tpu_custom_call.1} parent=5 // pred_fallthru
        _
      %p104 = scmp.le.s32.totalorder 1, %s15
      %p105 = scmp.lt.s32.totalorder %s15, 3
      %p106 = pnand %p104, %p105
      %p107 = pneg %p106
      // Predicated region
      $region21: #{tpu_custom_call.1} parent=5 // pred_check
        _
      $region22: #{tpu_custom_call.1} parent=5 // pred_check_branch
        %109 = sbr.rel (%p106) target = $region24
      $region23: #{tpu_custom_call.1} parent=5 // pred_region
        %s110 = ssub.s32 %s15, 1
        %s111 = sand.u32 %s28, 1
        %s112 = scalar_lea.sflag [#allocation5], %s111
        %s113 = sand.u32 %s28, 1
        %s114 = smul.addr %s113, 8
        %s115 = scalar_lea.vmem [#allocation4], %s114
        // Predicated region
        $region25: #{tpu_custom_call.1} parent=23 // pred_check
          %p116 = pneg %p41
        $region26: #{tpu_custom_call.1} parent=23 // pred_check_branch
          %118 = sbr.rel (%p116) target = $region28
        $region27: #{tpu_custom_call.1} parent=23 // pred_region
          %119 = dma.done %s112, 128
        $region28: #{tpu_custom_call.1} parent=23 // pred_fallthru
          _
        %s120 = sand.u32 %s28, 1
        %s121 = scalar_lea.sflag [#allocation5], %s120
        %s122 = sand.u32 %s28, 1
        %s123 = smul.addr %s122, 8
        %s124 = scalar_lea.vmem [#allocation4], %s123
        %p125 = pneg %p41
        %p126 = pneg %p38
        %p127 = pneg %p67
        %p128 = pneg %p64
        %s129 = sand.u32 %s54, 1
        %s130 = scalar_lea.sflag [#allocation6], %s129
        %s131 = sand.u32 %s54, 1
        %s132 = smul.addr %s131, 8
        %s133 = scalar_lea.vmem [#allocation7], %s132
        %v134 = vld [vmem:[%s115] sm:$0xff]
        %v135 = vmul.f32 %v134, %v134
        %136 = vadd.xlane.f32.xlu0 %v135
        %v137 = vpop.xlane.xlu0 %136
        %v138 = vadd.f32 %v137, 1e-10
        %s139 = sld [smem:[#allocation3]]
        %v140 = vrsqrt.pop %v138
        %v141 = vstv %s139
        %v142 = vmul.f32 %v141, %v140
        %v143 = vmul.f32 %v134, %v142
        %144 = vst [vmem:[%s133] sm:$0xff] %v143
        %s145 = sand.u32 %s54, 1
        %s146 = scalar_lea.sflag [#allocation6], %s145
        %s147 = sand.u32 %s54, 1
        %s148 = smul.addr %s147, 8
        %s149 = scalar_lea.vmem [#allocation7], %s148
        // Predicated region
        $region29: #{tpu_custom_call.1} parent=23 // pred_check
          %p150 = pneg %p64
        $region30: #{tpu_custom_call.1} parent=23 // pred_check_branch
          %152 = sbr.rel (%p150) target = $region32
        $region31: #{tpu_custom_call.1} parent=23 // pred_region
          %s154 = ssub.s32 128, 128
          %155 = vsyncadd %s146, %s154
          %s156 = smul.addr %s20, 128
          %s157 = scalar_lea.hbm %s2, %s156
          %s159 = sshll.u32 %s149, 4
          %s160 = int_to_ptr.vmem [resolvable:$true] %s159
          %162 = dma.vmem_to_hbm [thread:$0]  %s160, 128, %s157, %s146
        $region32: #{tpu_custom_call.1} parent=23 // pred_fallthru
          _
      $region24: #{tpu_custom_call.1} parent=5 // pred_fallthru
        _
      %p163 = scmp.le.s32.totalorder 2, %s15
      // Predicated region
      $region33: #{tpu_custom_call.1} parent=5 // pred_check
        %p164 = pneg %p163
      $region34: #{tpu_custom_call.1} parent=5 // pred_check_branch
        %166 = sbr.rel (%p164) target = $region36
      $region35: #{tpu_custom_call.1} parent=5 // pred_region
        %s167 = ssub.s32 %s15, 2
        // Predicated region
        $region37: #{tpu_custom_call.1} parent=35 // pred_check
          %p168 = pneg %p70
        $region38: #{tpu_custom_call.1} parent=35 // pred_check_branch
          %170 = sbr.rel (%p168) target = $region40
        $region39: #{tpu_custom_call.1} parent=35 // pred_region
          %s171 = sand.u32 %s55, 1
          %s172 = scalar_lea.sflag [#allocation6], %s171
          %s173 = sand.u32 %s55, 1
          %s174 = smul.addr %s173, 8
          %s175 = scalar_lea.vmem [#allocation7], %s174
          %176 = dma.done %s172, 128
        $region40: #{tpu_custom_call.1} parent=35 // pred_fallthru
          _
      $region36: #{tpu_custom_call.1} parent=5 // pred_fallthru
        _
    $region6: #{tpu_custom_call.1} parent=1 // loop_footer
      %s19 = sadd.s32 1, %s15
    $region7: #{tpu_custom_call.1} parent=1 // loop_footer_branch
      %14 = sbr.rel target = $region3
    $region8: #{tpu_custom_call.1} parent=1 // loop_exit
      _
    %177 = vsyncpa [#allocation5], 1
    %s178 = scalar_lea.sflag [#allocation5], 1
    %179 = vsyncpa %s178, 1
    %180 = vsyncpa [#allocation6], 1
    %s181 = scalar_lea.sflag [#allocation6], 1
    %182 = vsyncpa %s181, 1

</llo_original>
